<compile_context>
chip_gen: v6e
topology: v6e:2x2x1
jax: 0.10.0
libtpu: 0.0.40
codegen_flags: <defaults>
</compile_context>

<pallas_src>
import jax
import jax.numpy as jnp
from jax.experimental import pallas as pl
from jax.experimental.pallas import tpu as pltpu

N_EMBD = 384
HEAD_SIZE = 64
BLOCK_SIZE = 512  # causal-mask ceiling from the module; we require T <= BLOCK_SIZE


def _head_kernel(x_ref, w_ref, o_ref, q_scr, k_scr, v_scr):
    # x_ref: (1, T, C) f32 block (full sequence of one batch row)
    # w_ref: (C, 3H) bf16 fused [Wq | Wk | Wv]
    # o_ref: (1, tq, H) output block for this query tile
    # q_scr/k_scr/v_scr: (T, H) bf16 VMEM scratch, persistent across the q-tile axis
    qi = pl.program_id(1)
    tq = o_ref.shape[1]
    H = o_ref.shape[2]

    # ---- projections: once per batch row (qi == 0), cached in VMEM scratch ----
    @pl.when(qi == 0)
    def _project():
        xb = x_ref[0].astype(jnp.bfloat16)                            # (T, C)
        qkv = jnp.dot(xb, w_ref[...],
                      preferred_element_type=jnp.float32)             # (T, 3H) f32
        scale = H ** -0.5                                             # fold into q
        q_scr[...] = (qkv[:, :H] * scale).astype(jnp.bfloat16)
        k_scr[...] = qkv[:, H:2 * H].astype(jnp.bfloat16)
        v_scr[...] = qkv[:, 2 * H:].astype(jnp.bfloat16)

    # ---- this query tile ----
    q_start = pl.multiple_of(qi * tq, tq)
    q = q_scr[pl.ds(q_start, tq), :]                                  # (tq, H) bf16

    # ---- off-diagonal KV tiles j = 0 .. qi-1: fully visible, NO mask work ----
    def kv_step(j, carry):
        m_prev, l_prev, acc_prev = carry
        kv_start = pl.multiple_of(j * tq, tq)
        k_j = k_scr[pl.ds(kv_start, tq), :]                           # (tq, H) bf16
        v_j = v_scr[pl.ds(kv_start, tq), :]                           # (tq, H) bf16

        # q @ k_j^T without materializing the transpose
        s = jax.lax.dot_general(q, k_j, (((1,), (1,)), ((), ())),
                                preferred_element_type=jnp.float32)   # (tq, tq) f32

        m_cur = jnp.maximum(m_prev, jnp.max(s, axis=-1, keepdims=True))
        alpha = jnp.exp(m_prev - m_cur)                               # f32 rescale
        p = jnp.exp(s - m_cur)                                        # f32 probs
        l_cur = alpha * l_prev + jnp.sum(p, axis=-1, keepdims=True)
        acc_cur = alpha * acc_prev + jnp.dot(p.astype(jnp.bfloat16), v_j,
                                             preferred_element_type=jnp.float32)
        return m_cur, l_cur, acc_cur

    m0 = jnp.full((tq, 1), -jnp.inf, dtype=jnp.float32)
    l0 = jnp.zeros((tq, 1), dtype=jnp.float32)
    acc0 = jnp.zeros((tq, H), dtype=jnp.float32)
    m, l, acc = jax.lax.fori_loop(0, qi, kv_step, (m0, l0, acc0))

    # ---- diagonal tile j == qi: the only tile that needs the causal mask ----
    k_d = k_scr[pl.ds(q_start, tq), :]                                # (tq, H) bf16
    v_d = v_scr[pl.ds(q_start, tq), :]                                # (tq, H) bf16
    s = jax.lax.dot_general(q, k_d, (((1,), (1,)), ((), ())),
                            preferred_element_type=jnp.float32)       # (tq, tq) f32
    rows = jax.lax.broadcasted_iota(jnp.int32, (tq, 1), 0)
    cols = jax.lax.broadcasted_iota(jnp.int32, (1, tq), 1)
    s = jnp.where(cols <= rows, s, -jnp.inf)                          # intra-tile causal
    # NOTE: every row keeps its diagonal element, so m_new is always finite and
    # the -inf init can never produce a NaN through exp(m - m_new).
    m_new = jnp.maximum(m, jnp.max(s, axis=-1, keepdims=True))
    alpha = jnp.exp(m - m_new)
    p = jnp.exp(s - m_new)
    l = alpha * l + jnp.sum(p, axis=-1, keepdims=True)
    acc = alpha * acc + jnp.dot(p.astype(jnp.bfloat16), v_d,
                                preferred_element_type=jnp.float32)

    out = acc * pl.reciprocal(l, approx=True)                         # (tq, H) f32
    o_ref[0] = out.astype(o_ref.dtype)


def head_forward(x, wq, wk, wv):
    """x: (B, T, C) float32; wq/wk/wv: (C, H) float32 (pre-transposed nn.Linear)."""
    B, T, C = x.shape
    H = wq.shape[1]
    assert T <= BLOCK_SIZE and C == N_EMBD

    # query-tile size: 128 when it divides T, otherwise one tile for the whole seq
    tq = 128 if T % 128 == 0 else T
    nq = T // tq

    # fuse projection weights -> one wide MXU pass; pre-cast to bf16 (halves weight DMA)
    wqkv = jnp.concatenate([wq, wk, wv], axis=1).astype(jnp.bfloat16)  # (C, 3H)

    return pl.pallas_call(
        _head_kernel,
        out_shape=jax.ShapeDtypeStruct((B, T, H), x.dtype),
        grid_spec=pltpu.PrefetchScalarGridSpec(
            num_scalar_prefetch=0,
            grid=(B, nq),
            in_specs=[
                # full sequence of one batch row; block index constant across the
                # q-tile axis -> DMA'd once per batch row
                pl.BlockSpec((1, T, C), lambda b, q: (b, 0, 0)),
                # fused weights, resident for the whole kernel
                pl.BlockSpec((C, 3 * H), lambda b, q: (0, 0)),
            ],
            out_specs=pl.BlockSpec((1, tq, H), lambda b, q: (b, q, 0)),
            scratch_shapes=[
                pltpu.VMEM((T, H), jnp.bfloat16),  # q (pre-scaled)
                pltpu.VMEM((T, H), jnp.bfloat16),  # k
                pltpu.VMEM((T, H), jnp.bfloat16),  # v
            ],
        ),
        compiler_params=pltpu.CompilerParams(
            # q-tile axis must be "arbitrary": the qi==0 step fills the Q/K/V
            # scratch that later q-tiles of the same batch row reuse.
            dimension_semantics=("parallel", "arbitrary"),
        ),
    )(x, wqkv)


def head_reference(x, wq, wk, wv):
    """Pure-JAX f32 reference mirroring the PyTorch forward (eval mode)."""
    q = x @ wq
    k = x @ wk
    v = x @ wv
    w = (q @ jnp.swapaxes(k, -2, -1)) * (q.shape[-1] ** -0.5)
    T = x.shape[1]
    mask = jnp.tril(jnp.ones((T, T), dtype=bool))
    w = jnp.where(mask[None, :, :], w, -jnp.inf)
    w = jax.nn.softmax(w, axis=-1)
    return w @ v


if __name__ == "__main__":
    key = jax.random.PRNGKey(0)
    kx, kq, kk, kv = jax.random.split(key, 4)

    # nn.Linear(n_embd, head_size, bias=False) weight is (head_size, n_embd);
    # y = x @ W.T, so store the transpose (n_embd, head_size) directly.
    bound = 1.0 / (N_EMBD ** 0.5)
    wq = jax.random.uniform(kq, (N_EMBD, HEAD_SIZE), jnp.float32, -bound, bound)
    wk = jax.random.uniform(kk, (N_EMBD, HEAD_SIZE), jnp.float32, -bound, bound)
    wv = jax.random.uniform(kv, (N_EMBD, HEAD_SIZE), jnp.float32, -bound, bound)

    # small-shape check (single q tile, exercises the diagonal-only path)
    B, T = 2, 8
    x = jax.random.normal(kx, (B, T, N_EMBD), dtype=jnp.float32)
    out = head_forward(x, wq, wk, wv)
    jax.block_until_ready(out)
    ref = head_reference(x, wq, wk, wv)
    assert out.shape == (B, T, HEAD_SIZE)
    # bf16 MXU path vs f32 reference -> modest tolerance
    assert jnp.allclose(out, ref, atol=5e-2, rtol=5e-2), "mismatch vs reference (T=8)"

    # full block_size check (exercises q-tiling + off-diagonal/diagonal split)
    T2 = BLOCK_SIZE
    x2 = jax.random.normal(kx, (B, T2, N_EMBD), dtype=jnp.float32)
    out2 = head_forward(x2, wq, wk, wv)
    jax.block_until_ready(out2)
    ref2 = head_reference(x2, wq, wk, wv)
    assert out2.shape == (B, T2, HEAD_SIZE)
    assert jnp.allclose(out2, ref2, atol=5e-2, rtol=5e-2), "mismatch vs reference (T=512)"

    print("KERNEL_OK")
</pallas_src>

<mosaic_0001>
module attributes {stable_mosaic.version = 11 : i64} {
  func.func @_head_kernel(%arg0: i32, %arg1: i32, %arg2: memref<1x8x384xf32, #tpu.memory_space<vmem>>, %arg3: memref<384x192xbf16, #tpu.memory_space<vmem>>, %arg4: memref<1x8x64xf32, #tpu.memory_space<vmem>>, %arg5: memref<8x64xbf16, #tpu.memory_space<vmem>>, %arg6: memref<8x64xbf16, #tpu.memory_space<vmem>>, %arg7: memref<8x64xbf16, #tpu.memory_space<vmem>>) attributes {dimension_semantics = [#tpu.dimension_semantics<parallel>, #tpu.dimension_semantics<arbitrary>], iteration_bounds = array<i64: 2, 1>, scalar_prefetch = 0 : i64, scratch_operands = 3 : i64, tpu.core_type = #tpu.core_type<tc>, window_params = [{transform_indices = @transform_0, window_bounds = array<i64: 1, 8, 384>}, {pipeline_mode = #tpu.pipeline_mode<synchronous>, transform_indices = @transform_1, window_bounds = array<i64: 384, 192>}, {transform_indices = @transform_2, window_bounds = array<i64: 1, 8, 64>}]} {
    %c0_i32 = arith.constant 0 : i32
    %0 = arith.cmpi eq, %arg1, %c0_i32 : i32
    %1 = arith.extui %0 : i1 to i32
    %c0_i32_0 = arith.constant 0 : i32
    %2 = arith.cmpi ne, %1, %c0_i32_0 : i32
    scf.if %2 {
      %c0_14 = arith.constant 0 : index
      %c0_15 = arith.constant 0 : index
      %c0_16 = arith.constant 0 : index
      %48 = vector.load %arg2[%c0_14, %c0_15, %c0_16] : memref<1x8x384xf32, #tpu.memory_space<vmem>>, vector<1x8x384xf32>
      %49 = vector.shape_cast %48 : vector<1x8x384xf32> to vector<8x384xf32>
      %50 = arith.truncf %49 : vector<8x384xf32> to vector<8x384xbf16>
      %c0_17 = arith.constant 0 : index
      %c0_18 = arith.constant 0 : index
      %51 = vector.load %arg3[%c0_17, %c0_18] : memref<384x192xbf16, #tpu.memory_space<vmem>>, vector<384x192xbf16>
      %cst_19 = arith.constant dense<0.000000e+00> : vector<8x192xf32>
      %52 = tpu.matmul %50, %51, %cst_19 {dimension_numbers = #tpu.dot_dimension_numbers<[1], [0], [0], [1], [0, 0, 1, 1], [], []>} : vector<8x384xbf16>, vector<384x192xbf16>, vector<8x192xf32> -> vector<8x192xf32>
      %53 = vector.extract_strided_slice %52 {offsets = [0, 0], sizes = [8, 64], strides = [1, 1]} : vector<8x192xf32> to vector<8x64xf32>
      %cst_20 = arith.constant 1.250000e-01 : f32
      %54 = vector.broadcast %cst_20 : f32 to vector<8x64xf32>
      %55 = arith.mulf %53, %54 : vector<8x64xf32>
      %56 = arith.truncf %55 : vector<8x64xf32> to vector<8x64xbf16>
      %c0_21 = arith.constant 0 : index
      %c0_22 = arith.constant 0 : index
      %57 = vector.load %arg5[%c0_21, %c0_22] : memref<8x64xbf16, #tpu.memory_space<vmem>>, vector<8x64xbf16>
      tpu.vector_store %arg5[%c0_21, %c0_22], %56 {strides = array<i32>} : memref<8x64xbf16, #tpu.memory_space<vmem>>, vector<8x64xbf16>,
      %58 = vector.extract_strided_slice %52 {offsets = [0, 64], sizes = [8, 64], strides = [1, 1]} : vector<8x192xf32> to vector<8x64xf32>
      %59 = arith.truncf %58 : vector<8x64xf32> to vector<8x64xbf16>
      %c0_23 = arith.constant 0 : index
      %c0_24 = arith.constant 0 : index
      %60 = vector.load %arg6[%c0_23, %c0_24] : memref<8x64xbf16, #tpu.memory_space<vmem>>, vector<8x64xbf16>
      tpu.vector_store %arg6[%c0_23, %c0_24], %59 {strides = array<i32>} : memref<8x64xbf16, #tpu.memory_space<vmem>>, vector<8x64xbf16>,
      %61 = vector.extract_strided_slice %52 {offsets = [0, 128], sizes = [8, 64], strides = [1, 1]} : vector<8x192xf32> to vector<8x64xf32>
      %62 = arith.truncf %61 : vector<8x64xf32> to vector<8x64xbf16>
      %c0_25 = arith.constant 0 : index
      %c0_26 = arith.constant 0 : index
      %63 = vector.load %arg7[%c0_25, %c0_26] : memref<8x64xbf16, #tpu.memory_space<vmem>>, vector<8x64xbf16>
      tpu.vector_store %arg7[%c0_25, %c0_26], %62 {strides = array<i32>} : memref<8x64xbf16, #tpu.memory_space<vmem>>, vector<8x64xbf16>,
    } else {
    }
    %c8_i32 = arith.constant 8 : i32
    %3 = arith.muli %arg1, %c8_i32 : i32
    %4 = tpu.assume_multiple %3, 8 : i32
    %5 = arith.index_cast %4 : i32 to index
    %c0 = arith.constant 0 : index
    %6 = vector.load %arg5[%5, %c0] : memref<8x64xbf16, #tpu.memory_space<vmem>>, vector<8x64xbf16>
    %cst = arith.constant 0xFF800000 : f32
    %7 = vector.broadcast %cst : f32 to vector<8x1xf32>
    %cst_1 = arith.constant 0.000000e+00 : f32
    %8 = vector.broadcast %cst_1 : f32 to vector<8x1xf32>
    %cst_2 = arith.constant 0.000000e+00 : f32
    %9 = vector.broadcast %cst_2 : f32 to vector<8x64xf32>
    %c0_i32_3 = arith.constant 0 : i32
    %10 = arith.subi %arg1, %c0_i32_3 : i32
    %11 = arith.addi %c0_i32_3, %10 : i32
    %c1_i32 = arith.constant 1 : i32
    %12:3 = scf.for %arg8 = %c0_i32_3 to %11 step %c1_i32 iter_args(%arg9 = %7, %arg10 = %8, %arg11 = %9) -> (vector<8x1xf32>, vector<8x1xf32>, vector<8x64xf32>)  : i32 {
      %c8_i32_14 = arith.constant 8 : i32
      %48 = arith.muli %arg8, %c8_i32_14 : i32
      %49 = tpu.assume_multiple %48, 8 : i32
      %50 = arith.index_cast %49 : i32 to index
      %c0_15 = arith.constant 0 : index
      %51 = vector.load %arg6[%50, %c0_15] : memref<8x64xbf16, #tpu.memory_space<vmem>>, vector<8x64xbf16>
      %52 = arith.index_cast %49 : i32 to index
      %c0_16 = arith.constant 0 : index
      %53 = vector.load %arg7[%52, %c0_16] : memref<8x64xbf16, #tpu.memory_space<vmem>>, vector<8x64xbf16>
      %cst_17 = arith.constant dense<0.000000e+00> : vector<8x8xf32>
      %54 = tpu.matmul %6, %51, %cst_17 {dimension_numbers = #tpu.dot_dimension_numbers<[1], [1], [0], [0], [0, 0, 1, 0], [], []>} : vector<8x64xbf16>, vector<8x64xbf16>, vector<8x8xf32> -> vector<8x8xf32>
      %cst_18 = arith.constant dense<0xFF800000> : vector<8xf32>
      %55 = vector.multi_reduction <maximumf>, %54, %cst_18 [1] : vector<8x8xf32> to vector<8xf32>
      %56 = vector.shape_cast %55 : vector<8xf32> to vector<8x1xf32>
      %57 = arith.maximumf %arg9, %56 : vector<8x1xf32>
      %58 = arith.subf %arg9, %57 : vector<8x1xf32>
      %59 = math.exp %58 : vector<8x1xf32>
      %60 = vector.broadcast %57 : vector<8x1xf32> to vector<8x8xf32>
      %61 = arith.subf %54, %60 : vector<8x8xf32>
      %62 = math.exp %61 : vector<8x8xf32>
      %63 = arith.mulf %59, %arg10 : vector<8x1xf32>
      %cst_19 = arith.constant dense<0.000000e+00> : vector<8xf32>
      %64 = vector.multi_reduction <add>, %62, %cst_19 [1] : vector<8x8xf32> to vector<8xf32>
      %65 = vector.shape_cast %64 : vector<8xf32> to vector<8x1xf32>
      %66 = arith.addf %63, %65 : vector<8x1xf32>
      %67 = vector.broadcast %59 : vector<8x1xf32> to vector<8x64xf32>
      %68 = arith.mulf %67, %arg11 : vector<8x64xf32>
      %69 = arith.truncf %62 : vector<8x8xf32> to vector<8x8xbf16>
      %cst_20 = arith.constant dense<0.000000e+00> : vector<8x64xf32>
      %70 = tpu.matmul %69, %53, %cst_20 {dimension_numbers = #tpu.dot_dimension_numbers<[1], [0], [0], [1], [0, 0, 1, 1], [], []>} : vector<8x8xbf16>, vector<8x64xbf16>, vector<8x64xf32> -> vector<8x64xf32>
      %71 = arith.addf %68, %70 : vector<8x64xf32>
      scf.yield %57, %66, %71 : vector<8x1xf32>, vector<8x1xf32>, vector<8x64xf32>
    }
    %13 = arith.index_cast %4 : i32 to index
    %c0_4 = arith.constant 0 : index
    %14 = vector.load %arg6[%13, %c0_4] : memref<8x64xbf16, #tpu.memory_space<vmem>>, vector<8x64xbf16>
    %15 = arith.index_cast %4 : i32 to index
    %c0_5 = arith.constant 0 : index
    %16 = vector.load %arg7[%15, %c0_5] : memref<8x64xbf16, #tpu.memory_space<vmem>>, vector<8x64xbf16>
    %cst_6 = arith.constant dense<0.000000e+00> : vector<8x8xf32>
    %17 = tpu.matmul %6, %14, %cst_6 {dimension_numbers = #tpu.dot_dimension_numbers<[1], [1], [0], [0], [0, 0, 1, 0], [], []>} : vector<8x64xbf16>, vector<8x64xbf16>, vector<8x8xf32> -> vector<8x8xf32>
    %18 = tpu.iota {dimensions = array<i32: 0>} : vector<8x1xi32>
    %19 = tpu.iota {dimensions = array<i32: 1>} : vector<1x8xi32>
    %20 = vector.broadcast %19 : vector<1x8xi32> to vector<8x8xi32>
    %21 = vector.broadcast %18 : vector<8x1xi32> to vector<8x8xi32>
    %22 = arith.cmpi sle, %20, %21 : vector<8x8xi32>
    %cst_7 = arith.constant 0xFF800000 : f32
    %23 = vector.broadcast %cst_7 : f32 to vector<8x8xf32>
    %24 = arith.select %22, %17, %23 : vector<8x8xi1>, vector<8x8xf32>
    %cst_8 = arith.constant dense<0xFF800000> : vector<8xf32>
    %25 = vector.multi_reduction <maximumf>, %24, %cst_8 [1] : vector<8x8xf32> to vector<8xf32>
    %26 = vector.shape_cast %25 : vector<8xf32> to vector<8x1xf32>
    %27 = arith.maximumf %12#0, %26 : vector<8x1xf32>
    %28 = arith.subf %12#0, %27 : vector<8x1xf32>
    %29 = math.exp %28 : vector<8x1xf32>
    %30 = vector.broadcast %27 : vector<8x1xf32> to vector<8x8xf32>
    %31 = arith.subf %24, %30 : vector<8x8xf32>
    %32 = math.exp %31 : vector<8x8xf32>
    %33 = arith.mulf %29, %12#1 : vector<8x1xf32>
    %cst_9 = arith.constant dense<0.000000e+00> : vector<8xf32>
    %34 = vector.multi_reduction <add>, %32, %cst_9 [1] : vector<8x8xf32> to vector<8xf32>
    %35 = vector.shape_cast %34 : vector<8xf32> to vector<8x1xf32>
    %36 = arith.addf %33, %35 : vector<8x1xf32>
    %37 = vector.broadcast %29 : vector<8x1xf32> to vector<8x64xf32>
    %38 = arith.mulf %37, %12#2 : vector<8x64xf32>
    %39 = arith.truncf %32 : vector<8x8xf32> to vector<8x8xbf16>
    %cst_10 = arith.constant dense<0.000000e+00> : vector<8x64xf32>
    %40 = tpu.matmul %39, %16, %cst_10 {dimension_numbers = #tpu.dot_dimension_numbers<[1], [0], [0], [1], [0, 0, 1, 1], [], []>} : vector<8x8xbf16>, vector<8x64xbf16>, vector<8x64xf32> -> vector<8x64xf32>
    %41 = arith.addf %38, %40 : vector<8x64xf32>
    %42 = tpu.reciprocal %36 {approx = true} : vector<8x1xf32> -> vector<8x1xf32>
    %43 = vector.broadcast %42 : vector<8x1xf32> to vector<8x64xf32>
    %44 = arith.mulf %41, %43 : vector<8x64xf32>
    %c0_11 = arith.constant 0 : index
    %c0_12 = arith.constant 0 : index
    %c0_13 = arith.constant 0 : index
    %45 = vector.load %arg4[%c0_11, %c0_12, %c0_13] : memref<1x8x64xf32, #tpu.memory_space<vmem>>, vector<1x8x64xf32>
    %46 = vector.shape_cast %45 : vector<1x8x64xf32> to vector<8x64xf32>
    %47 = vector.shape_cast %44 : vector<8x64xf32> to vector<1x8x64xf32>
    tpu.vector_store %arg4[%c0_11, %c0_12, %c0_13], %47 {strides = array<i32>} : memref<1x8x64xf32, #tpu.memory_space<vmem>>, vector<1x8x64xf32>,
    return
  }
  func.func @transform_0(%arg0: i32, %arg1: i32) -> (i32, i32, i32) {
    %c0_i32 = arith.constant 0 : i32
    %c0_i32_0 = arith.constant 0 : i32
    %c0_i32_1 = arith.constant 0 : i32
    return %arg0, %c0_i32, %c0_i32_0 : i32, i32, i32
  }
  func.func @transform_1(%arg0: i32, %arg1: i32) -> (i32, i32) {
    %c0_i32 = arith.constant 0 : i32
    %c0_i32_0 = arith.constant 0 : i32
    %c0_i32_1 = arith.constant 0 : i32
    return %c0_i32, %c0_i32_0 : i32, i32
  }
  func.func @transform_2(%arg0: i32, %arg1: i32) -> (i32, i32, i32) {
    %c0_i32 = arith.constant 0 : i32
    %c0_i32_0 = arith.constant 0 : i32
    return %arg0, %arg1, %c0_i32 : i32, i32, i32
  }
}

</mosaic_0001>

<llo_original>
// kernel: tpu_custom_call.1
$region0: #{tpu_custom_call.1}
  #allocation0 [shape = 'u32[]', space=smem, size = 0x4, offset = 0x4, fixed_abs, tag = 'smem constant byte address 0x4 - core index']
  #allocation1 [shape = 'u32[144,128]{1,0:T(1,128)}', space=vmem, size = 0x12000, scoped, tag = 'internal scratch']
  #allocation2 [shape = 'bf16[8,64]{1,0:T(8,128)(2,1)}', space=vmem, size = 0x800, scoped, tag = 'scratch operand']
  #allocation3 [shape = 'bf16[8,64]{1,0:T(8,128)(2,1)}', space=vmem, size = 0x800, scoped, tag = 'scratch operand']
  #allocation4 [shape = 'bf16[8,64]{1,0:T(8,128)(2,1)}', space=vmem, size = 0x800, scoped, tag = 'scratch operand']
  %s0 = inlined_call_operand.vmem [shape: f32[2,8,384], index: 0, kind: input, shape index: {}]
  %s1 = inlined_call_operand.vmem [shape: bf16[384,192], index: 1, kind: input, shape index: {}]
  %s2 = inlined_call_operand.hbm [shape: f32[2,8,64], index: 2, kind: output, shape index: {}]
  %s3 = sld [smem:[#allocation0]]
  $region52: #{tpu_custom_call.1} parent=0
    _
  %s5 = ssub.s32 1, %s3
  %s6 = scalar_select 0, %s5, %s3
  $region1: #{tpu_custom_call.1} parent=0
    #allocation5 [shape = 'u8[8192]{0}', space=vmem, size = 0x2000, scoped, tag = 'output window, operand 0']
    #allocation6 [shape = 's32[2]{0}', space=sflag, size = 0x8, scoped, tag = 'scoped memory for tpu_custom_call.1']
    %7 = vsyncpa [#allocation6], 0
    %s8 = scalar_lea.sflag [#allocation6], 1
    %9 = vsyncpa %s8, 0
    loop: start=0, step=1, limit=4
    $region2: #{tpu_custom_call.1} parent=1 // loop_pre_header
      _
    $region3: #{tpu_custom_call.1} parent=1 // loop_header
      %s11 = sphi 0, %s15
      %p12 = scmp.ge.s32.totalorder %s11, 4
      %s18 = sphi 0, %s30
      %s19 = sphi 0, %s26
      %s20 = sphi 0, %s18
      %s21 = sphi 0, %s19
      %s22 = sphi 0, %s20
      %s23 = sphi 0, %s21
      %s33 = sphi 0, %s35
      %s36 = sphi 0, %s33
      %s37 = sphi 0, %s36
      %s53 = sphi 0, %s37
      %s57 = sphi 0, %s57
      %s59 = sphi 0, %s57
      %s60 = sphi 0, %s59
      %s74 = sphi 0, %s60
      %s82 = sphi 0, %s84
      %s85 = sphi 0, %s82
      %s86 = sphi 0, %s85
      %s102 = sphi 0, %s86
    $region4: #{tpu_custom_call.1} parent=1 // loop_header_branch
      %14 = sbr.rel (%p12) target = $region8
    $region5: #{tpu_custom_call.1} parent=1 // loop_body
      %s16 = ssub.s32 %s11, 1
      %s17 = ssub.s32 %s11, 2
      %s24 = sadd.s32 1, %s19
      %p25 = scmp.ge.s32.totalorder %s24, 1
      %s26 = scalar_select %p25, 0, %s24
      %s27 = sadd.s32 1, %s18
      %s28 = scalar_select %p25, %s27, %s18
      %p29 = scmp.ge.s32.totalorder %s28, 2
      %s30 = scalar_select %p29, 0, %s28
      %s31 = ssub.s32 %s18, %s30
      %p32 = scmp.eq.s32.totalorder %s31, 0
      %s34 = sadd.s32 %s33, 1
      %s35 = scalar_select %p32, %s33, %s34
      %p38 = pneg %p32
      %p39 = scmp.eq.s32.totalorder %s11, 1
      %p40 = por %p38, %p39
      %p41 = scmp.ne.s32.totalorder %s33, %s36
      %p42 = scmp.eq.s32.totalorder %s11, 0
      %p43 = por %p41, %p42
      %p44 = scmp.ne.s32.totalorder %s33, %s36
      %p45 = scmp.eq.s32.totalorder %s16, 1
      %p46 = por %p44, %p45
      %p47 = scmp.ne.s32.totalorder %s36, %s37
      %p48 = scmp.eq.s32.totalorder %s16, 0
      %p49 = por %p47, %p48
      %p50 = scmp.ne.s32.totalorder %s36, %s37
      %p51 = scmp.eq.s32.totalorder %s17, 1
      %p52 = por %p50, %p51
      %p54 = scmp.ne.s32.totalorder %s37, %s53
      %p55 = scmp.eq.s32.totalorder %s17, 0
      %p56 = por %p54, %p55
      %s58 = sadd.s32 %s57, 1
      %p61 = scmp.eq.s32.totalorder %s11, 1
      %p62 = scmp.ne.s32.totalorder %s57, %s59
      %p63 = scmp.eq.s32.totalorder %s11, 0
      %p64 = por %p62, %p63
      %p65 = scmp.ne.s32.totalorder %s57, %s59
      %p66 = scmp.eq.s32.totalorder %s16, 1
      %p67 = por %p65, %p66
      %p68 = scmp.ne.s32.totalorder %s59, %s60
      %p69 = scmp.eq.s32.totalorder %s16, 0
      %p70 = por %p68, %p69
      %p71 = scmp.ne.s32.totalorder %s59, %s60
      %p72 = scmp.eq.s32.totalorder %s17, 1
      %p73 = por %p71, %p72
      %p75 = scmp.ne.s32.totalorder %s60, %s74
      %p76 = scmp.eq.s32.totalorder %s17, 0
      %p77 = por %p75, %p76
      %s78 = ssub.s32 %s18, %s30
      %s79 = ssub.s32 %s19, %s26
      %s80 = sor.u32 %s78, %s79
      %p81 = scmp.eq.s32.totalorder %s80, 0
      %s83 = sadd.s32 %s82, 1
      %s84 = scalar_select %p81, %s82, %s83
      %p87 = pneg %p81
      %p88 = scmp.eq.s32.totalorder %s11, 1
      %p89 = por %p87, %p88
      %p90 = scmp.ne.s32.totalorder %s82, %s85
      %p91 = scmp.eq.s32.totalorder %s11, 0
      %p92 = por %p90, %p91
      %p93 = scmp.ne.s32.totalorder %s82, %s85
      %p94 = scmp.eq.s32.totalorder %s16, 1
      %p95 = por %p93, %p94
      %p96 = scmp.ne.s32.totalorder %s85, %s86
      %p97 = scmp.eq.s32.totalorder %s16, 0
      %p98 = por %p96, %p97
      %p99 = scmp.ne.s32.totalorder %s85, %s86
      %p100 = scmp.eq.s32.totalorder %s17, 1
      %p101 = por %p99, %p100
      %p103 = scmp.ne.s32.totalorder %s86, %s102
      %p104 = scmp.eq.s32.totalorder %s17, 0
      %p105 = por %p103, %p104
      %p106 = scmp.le.s32.totalorder 1, %s11
      %p107 = scmp.lt.s32.totalorder %s11, 3
      %p108 = pnand %p106, %p107
      %p109 = pneg %p108
      // Predicated region
      $region9: #{tpu_custom_call.1} parent=5 // pred_check
        _
      $region10: #{tpu_custom_call.1} parent=5 // pred_check_branch
        %111 = sbr.rel (%p108) target = $region12
      $region11: #{tpu_custom_call.1} parent=5 // pred_region
        %s112 = ssub.s32 %s11, 1
        // Predicated region
        $region13: #{tpu_custom_call.1} parent=11 // pred_check
          %p113 = pneg %p70
        $region14: #{tpu_custom_call.1} parent=11 // pred_check_branch
          %115 = sbr.rel (%p113) target = $region16
        $region15: #{tpu_custom_call.1} parent=11 // pred_region
          _
        $region16: #{tpu_custom_call.1} parent=11 // pred_fallthru
          _
      $region12: #{tpu_custom_call.1} parent=5 // pred_fallthru
        _
      %p116 = scmp.lt.s32.totalorder %s11, 2
      // Predicated region
      $region17: #{tpu_custom_call.1} parent=5 // pred_check
        %p117 = pneg %p116
      $region18: #{tpu_custom_call.1} parent=5 // pred_check_branch
        %119 = sbr.rel (%p117) target = $region20
      $region19: #{tpu_custom_call.1} parent=5 // pred_region
        // Predicated region
        $region21: #{tpu_custom_call.1} parent=19 // pred_check
          %p120 = pneg %p43
        $region22: #{tpu_custom_call.1} parent=19 // pred_check_branch
          %122 = sbr.rel (%p120) target = $region24
        $region23: #{tpu_custom_call.1} parent=19 // pred_region
          %p123 = scmp.lt.s32.totalorder %s18, 1
          %s124 = scalar_select %p123, %s18, 1
          %s125 = smul.addr %s124, 3
          %s126 = smul.addr %s125, 8
          %s127 = scalar_lea.vmem %s0, %s126
        $region24: #{tpu_custom_call.1} parent=19 // pred_fallthru
          _
      $region20: #{tpu_custom_call.1} parent=5 // pred_fallthru
        _
      %p128 = scmp.le.s32.totalorder 1, %s11
      %p129 = scmp.lt.s32.totalorder %s11, 3
      %p130 = pnand %p128, %p129
      %p131 = pneg %p130
      // Predicated region
      $region25: #{tpu_custom_call.1} parent=5 // pred_check
        _
      $region26: #{tpu_custom_call.1} parent=5 // pred_check_branch
        %133 = sbr.rel (%p130) target = $region28
      $region27: #{tpu_custom_call.1} parent=5 // pred_region
        %s134 = ssub.s32 %s11, 1
        %p135 = scmp.lt.s32.totalorder %s20, 1
        %s136 = scalar_select %p135, %s20, 1
        %s137 = smul.addr %s136, 3
        %s138 = smul.addr %s137, 8
        %s139 = scalar_lea.vmem %s0, %s138
        %p140 = pneg %p49
        %p141 = pneg %p46
        %p142 = pneg %p70
        %p143 = pneg %p67
        %p144 = pneg %p98
        %p145 = pneg %p95
        %s146 = sand.u32 %s85, 1
        %s147 = scalar_lea.sflag [#allocation6], %s146
        %s148 = sand.u32 %s85, 1
        %s149 = smul.addr %s148, 8
        %s150 = scalar_lea.vmem [#allocation5], %s149
        %p151 = scmp.lt.s32.totalorder %s20, 1
        %s152 = scalar_select %p151, %s20, 1
        %s153 = smul.addr %s152, 3
        %s154 = smul.addr %s153, 8
        %s155 = scalar_lea.vmem %s0, %s154
        %p157 = scmp.eq.s32.totalorder %s21, 0
        // Predicated region
        $region29: #{tpu_custom_call.1} parent=27 // pred_check
          %p158 = pneg %p157
        $region30: #{tpu_custom_call.1} parent=27 // pred_check_branch
          %160 = sbr.rel (%p158) target = $region32
        $region31: #{tpu_custom_call.1} parent=27 // pred_region
          %v161 = vld [vmem:[%s155] sm:$0xff]
          %v162 = vld [vmem:[%s155 + $0x8] sm:$0xff]
          %v163 = vld [vmem:[%s155 + $0x10] sm:$0xff]
          %v164 = vpack.c.bf16 %v161, %v161
          %v165 = vpack.c.bf16 %v162, %v162
          %v166 = vpack.c.bf16 %v163, %v163
          %v167 = vld [vmem:[%s1] sm:$0xff]
          %v168 = vld [vmem:[%s1 + $0x8] sm:$0xff]
          %v169 = vld [vmem:[%s1 + $0x10] sm:$0xff]
          %v170 = vld [vmem:[%s1 + $0x18] sm:$0xff]
          %v171 = vld [vmem:[%s1 + $0x20] sm:$0xff]
          %v172 = vld [vmem:[%s1 + $0x28] sm:$0xff]
          %v173 = vld [vmem:[%s1 + $0x30] sm:$0xff]
          %v174 = vld [vmem:[%s1 + $0x38] sm:$0xff]
          %v175 = vld [vmem:[%s1 + $0x40] sm:$0xff]
          %v176 = vld [vmem:[%s1 + $0x48] sm:$0xff]
          %v177 = vld [vmem:[%s1 + $0x50] sm:$0xff]
          %v178 = vld [vmem:[%s1 + $0x58] sm:$0xff]
          %v179 = vld [vmem:[%s1 + $0x60] sm:$0xff]
          %v180 = vld [vmem:[%s1 + $0x68] sm:$0xff]
          %v181 = vld [vmem:[%s1 + $0x70] sm:$0xff]
          %v182 = vld [vmem:[%s1 + $0x78] sm:$0xff]
          %v183 = vld [vmem:[%s1 + $0x80] sm:$0xff]
          %v184 = vld [vmem:[%s1 + $0x88] sm:$0xff]
          %v185 = vld [vmem:[%s1 + $0x90] sm:$0xff]
          %v186 = vld [vmem:[%s1 + $0x98] sm:$0xff]
          %v187 = vld [vmem:[%s1 + $0xa0] sm:$0xff]
          %v188 = vld [vmem:[%s1 + $0xa8] sm:$0xff]
          %v189 = vld [vmem:[%s1 + $0xb0] sm:$0xff]
          %v190 = vld [vmem:[%s1 + $0xb8] sm:$0xff]
          %v191 = vld [vmem:[%s1 + $0xc0] sm:$0xff]
          %v192 = vld [vmem:[%s1 + $0xc8] sm:$0xff]
          %v193 = vld [vmem:[%s1 + $0xd0] sm:$0xff]
          %v194 = vld [vmem:[%s1 + $0xd8] sm:$0xff]
          %v195 = vld [vmem:[%s1 + $0xe0] sm:$0xff]
          %v196 = vld [vmem:[%s1 + $0xe8] sm:$0xff]
          %v197 = vld [vmem:[%s1 + $0xf0] sm:$0xff]
          %v198 = vld [vmem:[%s1 + $0xf8] sm:$0xff]
          %v199 = vld [vmem:[%s1 + $0x100] sm:$0xff]
          %v200 = vld [vmem:[%s1 + $0x108] sm:$0xff]
          %v201 = vld [vmem:[%s1 + $0x110] sm:$0xff]
          %v202 = vld [vmem:[%s1 + $0x118] sm:$0xff]
          %v203 = vld [vmem:[%s1 + $0x120] sm:$0xff]
          %v204 = vld [vmem:[%s1 + $0x128] sm:$0xff]
          %v205 = vld [vmem:[%s1 + $0x130] sm:$0xff]
          %v206 = vld [vmem:[%s1 + $0x138] sm:$0xff]
          %v207 = vld [vmem:[%s1 + $0x140] sm:$0xff]
          %v208 = vld [vmem:[%s1 + $0x148] sm:$0xff]
          %v209 = vld [vmem:[%s1 + $0x150] sm:$0xff]
          %v210 = vld [vmem:[%s1 + $0x158] sm:$0xff]
          %v211 = vld [vmem:[%s1 + $0x160] sm:$0xff]
          %v212 = vld [vmem:[%s1 + $0x168] sm:$0xff]
          %v213 = vld [vmem:[%s1 + $0x170] sm:$0xff]
          %v214 = vld [vmem:[%s1 + $0x178] sm:$0xff]
          %v263 = vunpack.c.l.b16 %v167
          %v264 = vunpack.c.h.b16 %v167
          %v265 = vunpack.c.l.b16 %v168
          %v266 = vunpack.c.h.b16 %v168
          %v267 = vunpack.c.l.b16 %v169
          %v268 = vunpack.c.h.b16 %v169
          %v269 = vunpack.c.l.b16 %v170
          %v270 = vunpack.c.h.b16 %v170
          %v271 = vunpack.c.l.b16 %v171
          %v272 = vunpack.c.h.b16 %v171
          %v273 = vunpack.c.l.b16 %v172
          %v274 = vunpack.c.h.b16 %v172
          %v275 = vunpack.c.l.b16 %v173
          %v276 = vunpack.c.h.b16 %v173
          %v277 = vunpack.c.l.b16 %v174
          %v278 = vunpack.c.h.b16 %v174
          %v279 = vunpack.c.l.b16 %v175
          %v280 = vunpack.c.h.b16 %v175
          %v281 = vunpack.c.l.b16 %v176
          %v282 = vunpack.c.h.b16 %v176
          %v283 = vunpack.c.l.b16 %v177
          %v284 = vunpack.c.h.b16 %v177
          %v285 = vunpack.c.l.b16 %v178
          %v286 = vunpack.c.h.b16 %v178
          %v287 = vunpack.c.l.b16 %v179
          %v288 = vunpack.c.h.b16 %v179
          %v289 = vunpack.c.l.b16 %v180
          %v290 = vunpack.c.h.b16 %v180
          %v291 = vunpack.c.l.b16 %v181
          %v292 = vunpack.c.h.b16 %v181
          %v293 = vunpack.c.l.b16 %v182
          %v294 = vunpack.c.h.b16 %v182
          %v295 = vunpack.c.l.b16 %v183
          %v296 = vunpack.c.h.b16 %v183
          %v297 = vunpack.c.l.b16 %v184
          %v298 = vunpack.c.h.b16 %v184
          %v299 = vunpack.c.l.b16 %v185
          %v300 = vunpack.c.h.b16 %v185
          %v301 = vunpack.c.l.b16 %v186
          %v302 = vunpack.c.h.b16 %v186
          %v303 = vunpack.c.l.b16 %v187
          %v304 = vunpack.c.h.b16 %v187
          %v305 = vunpack.c.l.b16 %v188
          %v306 = vunpack.c.h.b16 %v188
          %v307 = vunpack.c.l.b16 %v189
          %v308 = vunpack.c.h.b16 %v189
          %v309 = vunpack.c.l.b16 %v190
          %v310 = vunpack.c.h.b16 %v190
          %v311 = vunpack.c.l.b16 %v191
          %v312 = vunpack.c.h.b16 %v191
          %v313 = vunpack.c.l.b16 %v192
          %v314 = vunpack.c.h.b16 %v192
          %v315 = vunpack.c.l.b16 %v193
          %v316 = vunpack.c.h.b16 %v193
          %v317 = vunpack.c.l.b16 %v194
          %v318 = vunpack.c.h.b16 %v194
          %v319 = vunpack.c.l.b16 %v195
          %v320 = vunpack.c.h.b16 %v195
          %v321 = vunpack.c.l.b16 %v196
          %v322 = vunpack.c.h.b16 %v196
          %v323 = vunpack.c.l.b16 %v197
          %v324 = vunpack.c.h.b16 %v197
          %v325 = vunpack.c.l.b16 %v198
          %v326 = vunpack.c.h.b16 %v198
          %v327 = vunpack.c.l.b16 %v199
          %v328 = vunpack.c.h.b16 %v199
          %v329 = vunpack.c.l.b16 %v200
          %v330 = vunpack.c.h.b16 %v200
          %v331 = vunpack.c.l.b16 %v201
          %v332 = vunpack.c.h.b16 %v201
          %v333 = vunpack.c.l.b16 %v202
          %v334 = vunpack.c.h.b16 %v202
          %v335 = vunpack.c.l.b16 %v203
          %v336 = vunpack.c.h.b16 %v203
          %v337 = vunpack.c.l.b16 %v204
          %v338 = vunpack.c.h.b16 %v204
          %v339 = vunpack.c.l.b16 %v205
          %v340 = vunpack.c.h.b16 %v205
          %v341 = vunpack.c.l.b16 %v206
          %v342 = vunpack.c.h.b16 %v206
          %v343 = vunpack.c.l.b16 %v207
          %v344 = vunpack.c.h.b16 %v207
          %v345 = vunpack.c.l.b16 %v208
          %v346 = vunpack.c.h.b16 %v208
          %v347 = vunpack.c.l.b16 %v209
          %v348 = vunpack.c.h.b16 %v209
          %v349 = vunpack.c.l.b16 %v210
          %v350 = vunpack.c.h.b16 %v210
          %v351 = vunpack.c.l.b16 %v211
          %v352 = vunpack.c.h.b16 %v211
          %v353 = vunpack.c.l.b16 %v212
          %v354 = vunpack.c.h.b16 %v212
          %v355 = vunpack.c.l.b16 %v213
          %v356 = vunpack.c.h.b16 %v213
          %v357 = vunpack.c.l.b16 %v214
          %v358 = vunpack.c.h.b16 %v214
          %v359 = vpack.c.b16 %v265, %v263
          %v360 = vpack.c.b16 %v266, %v264
          %v361 = vpack.c.b16 %v269, %v267
          %v362 = vpack.c.b16 %v270, %v268
          %v363 = vpack.c.b16 %v273, %v271
          %v364 = vpack.c.b16 %v274, %v272
          %v365 = vpack.c.b16 %v277, %v275
          %v366 = vpack.c.b16 %v278, %v276
          %v367 = vpack.c.b16 %v281, %v279
          %v368 = vpack.c.b16 %v282, %v280
          %v369 = vpack.c.b16 %v285, %v283
          %v370 = vpack.c.b16 %v286, %v284
          %v371 = vpack.c.b16 %v289, %v287
          %v372 = vpack.c.b16 %v290, %v288
          %v373 = vpack.c.b16 %v293, %v291
          %v374 = vpack.c.b16 %v294, %v292
          %v375 = vpack.c.b16 %v297, %v295
          %v376 = vpack.c.b16 %v298, %v296
          %v377 = vpack.c.b16 %v301, %v299
          %v378 = vpack.c.b16 %v302, %v300
          %v379 = vpack.c.b16 %v305, %v303
          %v380 = vpack.c.b16 %v306, %v304
          %v381 = vpack.c.b16 %v309, %v307
          %v382 = vpack.c.b16 %v310, %v308
          %v383 = vpack.c.b16 %v313, %v311
          %v384 = vpack.c.b16 %v314, %v312
          %v385 = vpack.c.b16 %v317, %v315
          %v386 = vpack.c.b16 %v318, %v316
          %v387 = vpack.c.b16 %v321, %v319
          %v388 = vpack.c.b16 %v322, %v320
          %v389 = vpack.c.b16 %v325, %v323
          %v390 = vpack.c.b16 %v326, %v324
          %v391 = vpack.c.b16 %v329, %v327
          %v392 = vpack.c.b16 %v330, %v328
          %v393 = vpack.c.b16 %v333, %v331
          %v394 = vpack.c.b16 %v334, %v332
          %v395 = vpack.c.b16 %v337, %v335
          %v396 = vpack.c.b16 %v338, %v336
          %v397 = vpack.c.b16 %v341, %v339
          %v398 = vpack.c.b16 %v342, %v340
          %v399 = vpack.c.b16 %v345, %v343
          %v400 = vpack.c.b16 %v346, %v344
          %v401 = vpack.c.b16 %v349, %v347
          %v402 = vpack.c.b16 %v350, %v348
          %v403 = vpack.c.b16 %v353, %v351
          %v404 = vpack.c.b16 %v354, %v352
          %v405 = vpack.c.b16 %v357, %v355
          %v406 = vpack.c.b16 %v358, %v356
          %455 = vmatprep.subr.bf16.mxu0 %v374
          %456 = vmatpush1.bf16.msra.mxu0 %v373
          %457 = vmatprep.subr.bf16.mxu0 %v372
          %458 = vmatpush1.bf16.msra.mxu0 %v371
          %459 = vmatprep.subr.bf16.mxu0 %v370
          %460 = vmatpush1.bf16.msra.mxu0 %v369
          %461 = vmatprep.subr.bf16.mxu0 %v368
          %462 = vmatpush1.bf16.msra.mxu0 %v367
          %463 = vmatprep.subr.bf16.mxu0 %v366
          %464 = vmatpush1.bf16.msra.mxu0 %v365
          %465 = vmatprep.subr.bf16.mxu0 %v364
          %466 = vmatpush1.bf16.msra.mxu0 %v363
          %467 = vmatprep.subr.bf16.mxu0 %v362
          %468 = vmatpush1.bf16.msra.mxu0 %v361
          %469 = vmatprep.subr.bf16.mxu0 %v360
          %470 = vmatpush1.bf16.msra.mxu0 %v359
          %471 = vmatprep.subr.bf16.mxu0 %v390
          %472 = vmatpush2.bf16.msra.mxu0 %v389
          %473 = vmatprep.subr.bf16.mxu0 %v388
          %474 = vmatpush2.bf16.msra.mxu0 %v387
          %475 = vmatprep.subr.bf16.mxu0 %v386
          %476 = vmatpush2.bf16.msra.mxu0 %v385
          %477 = vmatprep.subr.bf16.mxu0 %v384
          %478 = vmatpush2.bf16.msra.mxu0 %v383
          %479 = vmatprep.subr.bf16.mxu0 %v382
          %480 = vmatpush2.bf16.msra.mxu0 %v381
          %481 = vmatprep.subr.bf16.mxu0 %v380
          %482 = vmatpush2.bf16.msra.mxu0 %v379
          %483 = vmatprep.subr.bf16.mxu0 %v378
          %484 = vmatpush2.bf16.msra.mxu0 %v377
          %485 = vmatprep.subr.bf16.mxu0 %v376
          %486 = vmatpush2.bf16.msra.mxu0 %v375
          %487 = vmatprep.mubr.bf16.mxu0 %v165
          %488 = vmatmul.mubr.bf16.gmra.mxu0 %v164
          %v489 = vpop.f32.mrf.mxu0
          %v490 = vadd.f32 0.0, %v489
          %v491 = vpop.f32.mrf.mxu0
          %v492 = vadd.f32 0.0, %v491
          %v493 = vpop.f32.mrf.mxu0
          %v494 = vpop.f32.mrf.mxu0
          %495 = vdwg.mxu0
          %496 = vmatprep.subr.bf16.mxu0 %v406
          %497 = vmatpush1.bf16.msra.mxu0 %v405
          %498 = vmatprep.subr.bf16.mxu0 %v404
          %499 = vmatpush1.bf16.msra.mxu0 %v403
          %500 = vmatprep.subr.bf16.mxu0 %v402
          %501 = vmatpush1.bf16.msra.mxu0 %v401
          %502 = vmatprep.subr.bf16.mxu0 %v400
          %503 = vmatpush1.bf16.msra.mxu0 %v399
          %504 = vmatprep.subr.bf16.mxu0 %v398
          %505 = vmatpush1.bf16.msra.mxu0 %v397
          %506 = vmatprep.subr.bf16.mxu0 %v396
          %507 = vmatpush1.bf16.msra.mxu0 %v395
          %508 = vmatprep.subr.bf16.mxu0 %v394
          %509 = vmatpush1.bf16.msra.mxu0 %v393
          %510 = vmatprep.subr.bf16.mxu0 %v392
          %511 = vmatpush1.bf16.msra.mxu0 %v391
          %512 = vmatprep.subr.bf16.mxu0 0
          %513 = vmatpush2.bf16.msra.mxu0 0
          %514 = vmatprep.subr.bf16.mxu0 0
          %515 = vmatpush2.bf16.msra.mxu0 0
          %516 = vmatprep.subr.bf16.mxu0 0
          %517 = vmatpush2.bf16.msra.mxu0 0
          %518 = vmatprep.subr.bf16.mxu0 0
          %519 = vmatpush2.bf16.msra.mxu0 0
          %520 = vmatprep.subr.bf16.mxu0 0
          %521 = vmatpush2.bf16.msra.mxu0 0
          %522 = vmatprep.subr.bf16.mxu0 0
          %523 = vmatpush2.bf16.msra.mxu0 0
          %524 = vmatprep.subr.bf16.mxu0 0
          %525 = vmatpush2.bf16.msra.mxu0 0
          %526 = vmatprep.subr.bf16.mxu0 0
          %527 = vmatpush2.bf16.msra.mxu0 0
          %528 = vmatprep.mubr.bf16.mxu0 0
          %529 = vmatmul.mubr.bf16.gmra.mxu0 %v166
          %v530 = vpop.f32.mrf.mxu0
          %v531 = vadd.f32 %v490, %v530
          %v532 = vpop.f32.mrf.mxu0
          %v533 = vadd.f32 %v492, %v532
          %v534 = vpop.f32.mrf.mxu0
          %v535 = vpop.f32.mrf.mxu0
          %536 = vdwg.mxu0
          %v537 = vmul.f32 %v531, 0.125
          %v538 = vpack.c.bf16 %v537, %v537
          %vm539 = vcmask 519168
          %540 = vst.msk [vmem:[#allocation2] sm:$0xf] %vm539, %v538
          %v541 = vpack.c.bf16 %v531, %v531
          %v543 = vunpack.c.l.b16 %v541
          %v544 = vpack.c.b16 %v543, %v543
          %545 = vrot.lane.b32.xlu0 %v544, 64
          %v546 = vpop.permute.xlu0 %545
          %548 = vst.msk [vmem:[#allocation3] sm:$0xf] %vm539, %v546
          %v549 = vpack.c.bf16 %v533, %v533
          %550 = vst.msk [vmem:[#allocation4] sm:$0xf] %vm539, %v549
        $region32: #{tpu_custom_call.1} parent=27 // pred_fallthru
          _
        %s551 = smul.u32 %s21, 8
        %s552 = sshra.s32 %s551, 3
        %s553 = sand.u32 %s551, 7
        %s554 = smul.addr %s552, 4
        %s555 = scalar_lea.vmem [#allocation2], %s554
        %v556 = vld [vmem:[%s555] sm:$0xf]
        // While loop
        $region33: #{tpu_custom_call.1} parent=27 // loop_pre_header
          _
        $region34: #{tpu_custom_call.1} parent=27 // loop_header
          %s558 = sphi 0, %s560
          %p559 = scmp.ge.s32.totalorder %s558, %s21
          %v563 = vphi -inf, %v626
          %v564 = vphi 0.0, %v637
          %v565 = vphi 0.0, %v687
        $region35: #{tpu_custom_call.1} parent=27 // loop_header_branch
          %562 = sbr.rel (%p559) target = $region39
        $region36: #{tpu_custom_call.1} parent=27 // loop_body
          %s566 = smul.u32 %s558, 8
          %s567 = sshra.s32 %s566, 3
          %s568 = sand.u32 %s566, 7
          %s569 = smul.addr %s567, 4
          %s570 = scalar_lea.vmem [#allocation3], %s569
          %v571 = vld [vmem:[%s570] sm:$0xf]
          %s572 = smul.addr %s567, 4
          %s573 = scalar_lea.vmem [#allocation4], %s572
          %v574 = vld [vmem:[%s573] sm:$0xf]
          %vm575 = vcmask 523264
          %v577 = vsel %vm575, %v556, 0
          %v580 = vsel %vm575, %v571, 0
          %582 = vmatprep.subr.bf16.mxu0 0
          %583 = vmatpush1.bf16.xpose.msra.mxu0 0
          %584 = vmatprep.subr.bf16.mxu0 0
          %585 = vmatpush1.bf16.xpose.msra.mxu0 0
          %586 = vmatprep.subr.bf16.mxu0 0
          %587 = vmatpush1.bf16.xpose.msra.mxu0 0
          %588 = vmatprep.subr.bf16.mxu0 0
          %589 = vmatpush1.bf16.xpose.msra.mxu0 0
          %590 = vmatprep.subr.bf16.mxu0 0
          %591 = vmatpush1.bf16.xpose.msra.mxu0 0
          %592 = vmatprep.subr.bf16.mxu0 0
          %593 = vmatpush1.bf16.xpose.msra.mxu0 0
          %594 = vmatprep.subr.bf16.mxu0 0
          %595 = vmatpush1.bf16.xpose.msra.mxu0 0
          %596 = vmatprep.subr.bf16.mxu0 0
          %597 = vmatpush1.bf16.xpose.msra.mxu0 %v580
          %598 = vmatprep.subr.bf16.mxu0 0
          %599 = vmatpush2.bf16.xpose.msra.mxu0 0
          %600 = vmatprep.subr.bf16.mxu0 0
          %601 = vmatpush2.bf16.xpose.msra.mxu0 0
          %602 = vmatprep.subr.bf16.mxu0 0
          %603 = vmatpush2.bf16.xpose.msra.mxu0 0
          %604 = vmatprep.subr.bf16.mxu0 0
          %605 = vmatpush2.bf16.xpose.msra.mxu0 0
          %606 = vmatprep.subr.bf16.mxu0 0
          %607 = vmatpush2.bf16.xpose.msra.mxu0 0
          %608 = vmatprep.subr.bf16.mxu0 0
          %609 = vmatpush2.bf16.xpose.msra.mxu0 0
          %610 = vmatprep.subr.bf16.mxu0 0
          %611 = vmatpush2.bf16.xpose.msra.mxu0 0
          %612 = vmatprep.subr.bf16.mxu0 0
          %613 = vmatpush2.bf16.xpose.msra.mxu0 0
          %614 = vmatprep.mubr.bf16.mxu0 0
          %615 = vmatmul.mubr.bf16.gmra.mxu0 %v577
          %v616 = vpop.f32.mrf.mxu0
          %v617 = vadd.f32 0.0, %v616
          %v618 = vpop.f32.mrf.mxu0
          %v619 = vpop.f32.mrf.mxu0
          %v620 = vpop.f32.mrf.mxu0
          %621 = vdwg.mxu0
          %vm622 = vcmask 64512
          %v623 = vsel %vm622, %v617, -inf
          %624 = vmax.xlane.f32.xlu0 %v623
          %v625 = vpop.xlane.xlu0 %624
          %v626 = vmax.f32 %v563, %v625
          %v627 = vsub.f32 %v563, %v626
          %v628 = vmul.f32 %v627, 1.442695
          %v629 = vpow.pop %v628
          %v630 = vsub.f32 %v617, %v626
          %v631 = vmul.f32 %v630, 1.442695
          %v632 = vpow.pop %v631
          %v633 = vmul.f32 %v629, %v564
          %v634 = vsel %vm622, %v632, 0.0
          %635 = vadd.xlane.f32.xlu0 %v634
          %v636 = vpop.xlane.xlu0 %635
          %v637 = vadd.f32 %v633, %v636
          %v638 = vmul.f32 %v629, %v565
          %v639 = vpack.c.bf16 %v632, %v632
          %v641 = vsel %vm622, %v639, 0
          %vm643 = vcmask 1043456
          %v645 = vsel %vm643, %v574, 0
          %647 = vmatprep.subr.bf16.mxu0 0
          %648 = vmatpush1.bf16.msra.mxu0 0
          %649 = vmatprep.subr.bf16.mxu0 0
          %650 = vmatpush1.bf16.msra.mxu0 0
          %651 = vmatprep.subr.bf16.mxu0 0
          %652 = vmatpush1.bf16.msra.mxu0 0
          %653 = vmatprep.subr.bf16.mxu0 0
          %654 = vmatpush1.bf16.msra.mxu0 0
          %655 = vmatprep.subr.bf16.mxu0 0
          %656 = vmatpush1.bf16.msra.mxu0 0
          %657 = vmatprep.subr.bf16.mxu0 0
          %658 = vmatpush1.bf16.msra.mxu0 0
          %659 = vmatprep.subr.bf16.mxu0 0
          %660 = vmatpush1.bf16.msra.mxu0 0
          %661 = vmatprep.subr.bf16.mxu0 0
          %662 = vmatpush1.bf16.msra.mxu0 %v645
          %663 = vmatprep.subr.bf16.mxu0 0
          %664 = vmatpush2.bf16.msra.mxu0 0
          %665 = vmatprep.subr.bf16.mxu0 0
          %666 = vmatpush2.bf16.msra.mxu0 0
          %667 = vmatprep.subr.bf16.mxu0 0
          %668 = vmatpush2.bf16.msra.mxu0 0
          %669 = vmatprep.subr.bf16.mxu0 0
          %670 = vmatpush2.bf16.msra.mxu0 0
          %671 = vmatprep.subr.bf16.mxu0 0
          %672 = vmatpush2.bf16.msra.mxu0 0
          %673 = vmatprep.subr.bf16.mxu0 0
          %674 = vmatpush2.bf16.msra.mxu0 0
          %675 = vmatprep.subr.bf16.mxu0 0
          %676 = vmatpush2.bf16.msra.mxu0 0
          %677 = vmatprep.subr.bf16.mxu0 0
          %678 = vmatpush2.bf16.msra.mxu0 0
          %679 = vmatprep.mubr.bf16.mxu0 0
          %680 = vmatmul.mubr.bf16.gmra.mxu0 %v641
          %v681 = vpop.f32.mrf.mxu0
          %v682 = vadd.f32 0.0, %v681
          %v683 = vpop.f32.mrf.mxu0
          %v684 = vpop.f32.mrf.mxu0
          %v685 = vpop.f32.mrf.mxu0
          %686 = vdwg.mxu0
          %v687 = vadd.f32 %v638, %v682
        $region37: #{tpu_custom_call.1} parent=27 // loop_footer
          %s560 = sadd.s32 %s558, 1
        $region38: #{tpu_custom_call.1} parent=27 // loop_footer_branch
          %557 = sbr.rel target = $region34
        $region39: #{tpu_custom_call.1} parent=27 // loop_exit
          _
        %s688 = smul.addr %s552, 4
        %s689 = scalar_lea.vmem [#allocation3], %s688
        %v690 = vld [vmem:[%s689] sm:$0xf]
        %s691 = smul.addr %s552, 4
        %s692 = scalar_lea.vmem [#allocation4], %s691
        %v693 = vld [vmem:[%s692] sm:$0xf]
        %vm694 = vcmask 523264
        %v696 = vsel %vm694, %v556, 0
        %v699 = vsel %vm694, %v690, 0
        %701 = vmatprep.subr.bf16.mxu0 0
        %702 = vmatpush1.bf16.xpose.msra.mxu0 0
        %703 = vmatprep.subr.bf16.mxu0 0
        %704 = vmatpush1.bf16.xpose.msra.mxu0 0
        %705 = vmatprep.subr.bf16.mxu0 0
        %706 = vmatpush1.bf16.xpose.msra.mxu0 0
        %707 = vmatprep.subr.bf16.mxu0 0
        %708 = vmatpush1.bf16.xpose.msra.mxu0 0
        %709 = vmatprep.subr.bf16.mxu0 0
        %710 = vmatpush1.bf16.xpose.msra.mxu0 0
        %711 = vmatprep.subr.bf16.mxu0 0
        %712 = vmatpush1.bf16.xpose.msra.mxu0 0
        %713 = vmatprep.subr.bf16.mxu0 0
        %714 = vmatpush1.bf16.xpose.msra.mxu0 0
        %715 = vmatprep.subr.bf16.mxu0 0
        %716 = vmatpush1.bf16.xpose.msra.mxu0 %v699
        %717 = vmatprep.subr.bf16.mxu0 0
        %718 = vmatpush2.bf16.xpose.msra.mxu0 0
        %719 = vmatprep.subr.bf16.mxu0 0
        %720 = vmatpush2.bf16.xpose.msra.mxu0 0
        %721 = vmatprep.subr.bf16.mxu0 0
        %722 = vmatpush2.bf16.xpose.msra.mxu0 0
        %723 = vmatprep.subr.bf16.mxu0 0
        %724 = vmatpush2.bf16.xpose.msra.mxu0 0
        %725 = vmatprep.subr.bf16.mxu0 0
        %726 = vmatpush2.bf16.xpose.msra.mxu0 0
        %727 = vmatprep.subr.bf16.mxu0 0
        %728 = vmatpush2.bf16.xpose.msra.mxu0 0
        %729 = vmatprep.subr.bf16.mxu0 0
        %730 = vmatpush2.bf16.xpose.msra.mxu0 0
        %731 = vmatprep.subr.bf16.mxu0 0
        %732 = vmatpush2.bf16.xpose.msra.mxu0 0
        %733 = vmatprep.mubr.bf16.mxu0 0
        %734 = vmatmul.mubr.bf16.gmra.mxu0 %v696
        %v735 = vpop.f32.mrf.mxu0
        %v736 = vadd.f32 0.0, %v735
        %v737 = vpop.f32.mrf.mxu0
        %v738 = vpop.f32.mrf.mxu0
        %v739 = vpop.f32.mrf.mxu0
        %740 = vdwg.mxu0
        %v741 = vlaneseq
        %v742 = vshrl.u32 %v741, 7
        %v743 = vlaneseq
        %v744 = vand.u32 %v743, 127
        %vm745 = vcmp.le.s32.totalorder %v744, %v742
        %v746 = vsel %vm745, %v736, -inf
        %vm747 = vcmask 64512
        %v748 = vsel %vm747, %v746, -inf
        %749 = vmax.xlane.f32.xlu0 %v748
        %v750 = vpop.xlane.xlu0 %749
        %v751 = vmax.f32 %v563, %v750
        %v752 = vsub.f32 %v563, %v751
        %v753 = vmul.f32 %v752, 1.442695
        %v754 = vpow.pop %v753
        %v755 = vsub.f32 %v746, %v751
        %v756 = vmul.f32 %v755, 1.442695
        %v757 = vpow.pop %v756
        %v758 = vmul.f32 %v754, %v564
        %v759 = vsel %vm747, %v757, 0.0
        %760 = vadd.xlane.f32.xlu0 %v759
        %v761 = vpop.xlane.xlu0 %760
        %v762 = vadd.f32 %v758, %v761
        %v763 = vmul.f32 %v754, %v565
        %v764 = vpack.c.bf16 %v757, %v757
        %v766 = vsel %vm747, %v764, 0
        %vm768 = vcmask 1043456
        %v770 = vsel %vm768, %v693, 0
        %772 = vmatprep.subr.bf16.mxu0 0
        %773 = vmatpush1.bf16.msra.mxu0 0
        %774 = vmatprep.subr.bf16.mxu0 0
        %775 = vmatpush1.bf16.msra.mxu0 0
        %776 = vmatprep.subr.bf16.mxu0 0
        %777 = vmatpush1.bf16.msra.mxu0 0
        %778 = vmatprep.subr.bf16.mxu0 0
        %779 = vmatpush1.bf16.msra.mxu0 0
        %780 = vmatprep.subr.bf16.mxu0 0
        %781 = vmatpush1.bf16.msra.mxu0 0
        %782 = vmatprep.subr.bf16.mxu0 0
        %783 = vmatpush1.bf16.msra.mxu0 0
        %784 = vmatprep.subr.bf16.mxu0 0
        %785 = vmatpush1.bf16.msra.mxu0 0
        %786 = vmatprep.subr.bf16.mxu0 0
        %787 = vmatpush1.bf16.msra.mxu0 %v770
        %788 = vmatprep.subr.bf16.mxu0 0
        %789 = vmatpush2.bf16.msra.mxu0 0
        %790 = vmatprep.subr.bf16.mxu0 0
        %791 = vmatpush2.bf16.msra.mxu0 0
        %792 = vmatprep.subr.bf16.mxu0 0
        %793 = vmatpush2.bf16.msra.mxu0 0
        %794 = vmatprep.subr.bf16.mxu0 0
        %795 = vmatpush2.bf16.msra.mxu0 0
        %796 = vmatprep.subr.bf16.mxu0 0
        %797 = vmatpush2.bf16.msra.mxu0 0
        %798 = vmatprep.subr.bf16.mxu0 0
        %799 = vmatpush2.bf16.msra.mxu0 0
        %800 = vmatprep.subr.bf16.mxu0 0
        %801 = vmatpush2.bf16.msra.mxu0 0
        %802 = vmatprep.subr.bf16.mxu0 0
        %803 = vmatpush2.bf16.msra.mxu0 0
        %804 = vmatprep.mubr.bf16.mxu0 0
        %805 = vmatmul.mubr.bf16.gmra.mxu0 %v766
        %v806 = vpop.f32.mrf.mxu0
        %v807 = vadd.f32 0.0, %v806
        %v808 = vpop.f32.mrf.mxu0
        %v809 = vpop.f32.mrf.mxu0
        %v810 = vpop.f32.mrf.mxu0
        %811 = vdwg.mxu0
        %v812 = vadd.f32 %v763, %v807
        %v813 = vrcp.pop %v762
        %v814 = vmul.f32 %v812, %v813
        %815 = vst.msk [vmem:[%s150] sm:$0xff] %vm694, %v814
        %s816 = sand.u32 %s85, 1
        %s817 = scalar_lea.sflag [#allocation6], %s816
        %s818 = sand.u32 %s85, 1
        %s819 = smul.addr %s818, 8
        %s820 = scalar_lea.vmem [#allocation5], %s819
        // Predicated region
        $region40: #{tpu_custom_call.1} parent=27 // pred_check
          %p821 = pneg %p95
        $region41: #{tpu_custom_call.1} parent=27 // pred_check_branch
          %823 = sbr.rel (%p821) target = $region43
        $region42: #{tpu_custom_call.1} parent=27 // pred_region
          %s825 = ssub.s32 128, 128
          %826 = vsyncadd %s817, %s825
          %s827 = sadd.s32 %s21, %s20
          %s828 = smul.addr %s827, 128
          %s829 = scalar_lea.hbm %s2, %s828
          %s831 = sshll.u32 %s820, 4
          %s832 = int_to_ptr.vmem [resolvable:$true] %s831
          %834 = dma.vmem_to_hbm [thread:$0]  %s832, 128, %s829, %s817
        $region43: #{tpu_custom_call.1} parent=27 // pred_fallthru
          _
      $region28: #{tpu_custom_call.1} parent=5 // pred_fallthru
        _
      %p835 = scmp.le.s32.totalorder 2, %s11
      // Predicated region
      $region44: #{tpu_custom_call.1} parent=5 // pred_check
        %p836 = pneg %p835
      $region45: #{tpu_custom_call.1} parent=5 // pred_check_branch
        %838 = sbr.rel (%p836) target = $region47
      $region46: #{tpu_custom_call.1} parent=5 // pred_region
        %s839 = ssub.s32 %s11, 2
        // Predicated region
        $region48: #{tpu_custom_call.1} parent=46 // pred_check
          %p840 = pneg %p101
        $region49: #{tpu_custom_call.1} parent=46 // pred_check_branch
          %842 = sbr.rel (%p840) target = $region51
        $region50: #{tpu_custom_call.1} parent=46 // pred_region
          %s843 = sand.u32 %s86, 1
          %s844 = scalar_lea.sflag [#allocation6], %s843
          %s845 = sand.u32 %s86, 1
          %s846 = smul.addr %s845, 8
          %s847 = scalar_lea.vmem [#allocation5], %s846
          %848 = dma.done %s844, 128
        $region51: #{tpu_custom_call.1} parent=46 // pred_fallthru
          _
      $region47: #{tpu_custom_call.1} parent=5 // pred_fallthru
        _
    $region6: #{tpu_custom_call.1} parent=1 // loop_footer
      %s15 = sadd.s32 1, %s11
    $region7: #{tpu_custom_call.1} parent=1 // loop_footer_branch
      %10 = sbr.rel target = $region3
    $region8: #{tpu_custom_call.1} parent=1 // loop_exit
      _
    %849 = vsyncpa [#allocation6], 1
    %s850 = scalar_lea.sflag [#allocation6], 1
    %851 = vsyncpa %s850, 1

</llo_original>
